<compile_context>
chip_gen: v7x
topology: tpu7x:2x2x1
jax: 0.10.0
libtpu: 0.0.40
codegen_flags: <defaults>
</compile_context>

<pallas_src>
import jax
import jax.numpy as jnp
from jax.experimental import pallas as pl
from jax.experimental.pallas import tpu as pltpu


def _round_up(x, m):
    return ((x + m - 1) // m) * m


def _pick_batch_tile(B, max_batch_tile):
    """Pick (TB, n_tiles): TB is a multiple of 8 (or == B for tiny B); when the
    batch is large enough we force >=2 tiles so dimension_semantics=("parallel",)
    can shard the batch axis across both v7x TensorCores."""
    tb_cap = max(8, (int(max_batch_tile) // 8) * 8)   # enforce multiple of 8
    if B <= 8:
        return B, 1                                    # single full block
    tb = min(tb_cap, _round_up(pl.cdiv(B, 2), 8))
    return tb, pl.cdiv(B, tb)


# --------------------------------------------------------------------------
# Fused path: the whole Linear->Tanh stack in ONE pallas_call; the running
# activation never leaves VMEM/vregs; weights stay VMEM-resident.
# --------------------------------------------------------------------------
def _make_fused_encoder_kernel(n_layers):
    def kernel(x_ref, *refs):
        # refs layout: w0, b0, w1, b1, ..., w_{L-1}, b_{L-1}, o_ref
        o_ref = refs[-1]
        h = x_ref[...]
        for i in range(n_layers):                      # unrolled layer chain
            w = refs[2 * i][...]                       # (Din_i, Dout_i)
            b = refs[2 * i + 1][...]                   # (1, Dout_i), broadcasts
            y = jnp.dot(h, w, preferred_element_type=jnp.float32) + b
            h = jnp.tanh(y)                            # tanh -> EUP slot
        o_ref[...] = h.astype(o_ref.dtype)
    return kernel


def _encoder_fused(x_padded, params, TB, n_tiles, dout, cost, vmem_limit):
    B_pad, Din = x_padded.shape
    n_layers = len(params)

    in_specs = [pl.BlockSpec((TB, Din), lambda i: (i, 0))]
    flat_inputs = [x_padded]
    for (w_t, b) in params:
        din_i, dout_i = w_t.shape
        # Constant-index weight/bias blocks: fetched once, kept resident across
        # all batch tiles, and single-buffered (no wasted 2nd VMEM buffer).
        in_specs.append(pl.BlockSpec((din_i, dout_i), lambda i: (0, 0),
                                     pipeline_mode=pl.Buffered(buffer_count=1)))
        in_specs.append(pl.BlockSpec((1, dout_i), lambda i: (0, 0),
                                     pipeline_mode=pl.Buffered(buffer_count=1)))
        flat_inputs.append(w_t)
        flat_inputs.append(b)

    return pl.pallas_call(
        _make_fused_encoder_kernel(n_layers),
        out_shape=jax.ShapeDtypeStruct((B_pad, dout), x_padded.dtype),
        grid=(n_tiles,),
        in_specs=in_specs,
        # Unpadded Dout: last block dim == full array dim, HBM store is the
        # exact useful bytes (no 16x writeback amplification).
        out_specs=pl.BlockSpec((TB, dout), lambda i: (i, 0)),
        compiler_params=pltpu.CompilerParams(
            dimension_semantics=("parallel",),
            vmem_limit_bytes=vmem_limit,
        ),
        cost_estimate=cost,
    )(*flat_inputs)


# --------------------------------------------------------------------------
# Fallback path: used only when the full weight stack does not fit resident in
# VMEM (wide layers, esp. on v7x's 64 MiB).  One pallas_call per layer with the
# output-feature dim tiled so only a (Din_i, TN) weight slab is live at a time.
# TODO(synk): add a K-tiled (reduction) grid for layers whose input width alone
# exceeds the VMEM budget.
# --------------------------------------------------------------------------
def _layer_kernel(x_ref, w_ref, b_ref, o_ref):
    o_ref[...] = jnp.tanh(
        jnp.dot(x_ref[...], w_ref[...], preferred_element_type=jnp.float32)
        + b_ref[...]
    ).astype(o_ref.dtype)


def _encoder_layerwise(x_padded, params, TB, n_tiles, vmem_limit):
    h = x_padded
    for (w_t, b) in params:
        din_i, dout_i = w_t.shape
        tn = 512 if (dout_i % 128 == 0 and dout_i > 512) else dout_i
        nj = pl.cdiv(dout_i, tn)
        h = pl.pallas_call(
            _layer_kernel,
            out_shape=jax.ShapeDtypeStruct((h.shape[0], dout_i), h.dtype),
            grid=(n_tiles, nj),
            in_specs=[
                pl.BlockSpec((TB, din_i), lambda i, j: (i, 0)),
                pl.BlockSpec((din_i, tn), lambda i, j: (0, j)),
                pl.BlockSpec((1, tn), lambda i, j: (0, j)),
            ],
            out_specs=pl.BlockSpec((TB, tn), lambda i, j: (i, j)),
            compiler_params=pltpu.CompilerParams(
                dimension_semantics=("parallel", "parallel"),
                vmem_limit_bytes=vmem_limit,
            ),
        )(h, w_t, b)
    return h


# --------------------------------------------------------------------------
# Wrapper
# --------------------------------------------------------------------------
def encoder_forward_pallas(x, params, *, max_batch_tile=2048,
                           weight_budget_bytes=24 << 20):
    """Fused encoder forward.

    x      : (B, Din) float32
    params : list of (w_t, b) with w_t: (Din_i, Dout_i), b: (1, Dout_i)
    returns (B, Dout_last) float32
    """
    B, Din = x.shape
    Dout = params[-1][0].shape[1]

    TB, n_tiles = _pick_batch_tile(B, max_batch_tile)
    B_pad = n_tiles * TB
    x_padded = x if B_pad == B else jnp.pad(x, ((0, B_pad - B), (0, 0)))

    itemsize = 4  # fp32
    wb_bytes = sum(int(w.size) + int(b.size) for w, b in params) * itemsize
    needed = (2 * TB * Din + 2 * TB * Dout) * itemsize + wb_bytes
    vmem_limit = int(min(64 << 20, max(2 * needed + (4 << 20), 16 << 20)))

    flops = 2 * B_pad * sum(w.shape[0] * w.shape[1] for w, _ in params)
    trans = B_pad * sum(w.shape[1] for w, _ in params)
    bytes_accessed = itemsize * B_pad * (Din + Dout) + wb_bytes
    cost = pl.CostEstimate(flops=flops, transcendentals=trans,
                           bytes_accessed=bytes_accessed)

    if wb_bytes <= weight_budget_bytes:
        out = _encoder_fused(x_padded, params, TB, n_tiles, Dout, cost, vmem_limit)
    else:
        out = _encoder_layerwise(x_padded, params, TB, n_tiles, vmem_limit)

    return out[:B] if B_pad != B else out


def init_encoder_params(key, layers_encode):
    """Deterministic init matching nn.Linear(layers[i], layers[i+1]) defaults
    (U(-1/sqrt(fan_in), 1/sqrt(fan_in))).  Weights stored transposed as
    (in_features, out_features) so each layer is y = tanh(x @ W + b)."""
    params = []
    for i in range(len(layers_encode) - 1):
        fan_in, fan_out = layers_encode[i], layers_encode[i + 1]
        key, kw, kb = jax.random.split(key, 3)
        bound = 1.0 / jnp.sqrt(jnp.float32(fan_in))
        w_t = jax.random.uniform(kw, (fan_in, fan_out), dtype=jnp.float32,
                                 minval=-bound, maxval=bound)
        b = jax.random.uniform(kb, (1, fan_out), dtype=jnp.float32,
                               minval=-bound, maxval=bound)
        params.append((w_t, b))
    return params


@jax.jit
def encoder_forward(x, params):
    return encoder_forward_pallas(x, params)


def encoder_reference(x, params):
    h = x
    for w_t, b in params:
        h = jnp.tanh(h @ w_t + b)
    return h


if __name__ == "__main__":
    key = jax.random.PRNGKey(0)
    k_in, k_in2, k_params = jax.random.split(key, 3)

    layers_encode = [32, 64, 16, 8]   # matches Encoder(layers_encode)
    params = init_encoder_params(k_params, layers_encode)

    # --- test 1: small batch, single tile ---------------------------------
    x = jax.random.normal(k_in, (8, layers_encode[0]), dtype=jnp.float32)
    out = jax.block_until_ready(encoder_forward(x, params))
    ref = encoder_reference(x, params)
    assert out.shape == (8, layers_encode[-1])
    assert jnp.allclose(out, ref, atol=1e-5, rtol=1e-5), "mismatch (single tile)"

    # --- test 2: multi-tile batch (exercises padding + parallel grid) -----
    x2 = jax.random.normal(k_in2, (24, layers_encode[0]), dtype=jnp.float32)
    out2 = jax.block_until_ready(encoder_forward(x2, params))
    ref2 = encoder_reference(x2, params)
    assert out2.shape == (24, layers_encode[-1])
    assert jnp.allclose(out2, ref2, atol=1e-5, rtol=1e-5), "mismatch (multi tile)"

    # --- test 3: force the VMEM-residency fallback path -------------------
    forced = jax.jit(
        lambda a, p: encoder_forward_pallas(a, p, weight_budget_bytes=0)
    )(x, params)
    forced = jax.block_until_ready(forced)
    assert jnp.allclose(forced, ref, atol=1e-5, rtol=1e-5), "mismatch (fallback)"

    print("KERNEL_OK")
</pallas_src>

<mosaic_0001>
module attributes {stable_mosaic.version = 11 : i64} {
  func.func @kernel(%arg0: i32, %arg1: memref<8x32xf32, #tpu.memory_space<vmem>>, %arg2: memref<32x64xf32, #tpu.memory_space<vmem>>, %arg3: memref<1x64xf32, #tpu.memory_space<vmem>>, %arg4: memref<64x16xf32, #tpu.memory_space<vmem>>, %arg5: memref<1x16xf32, #tpu.memory_space<vmem>>, %arg6: memref<16x8xf32, #tpu.memory_space<vmem>>, %arg7: memref<1x8xf32, #tpu.memory_space<vmem>>, %arg8: memref<8x8xf32, #tpu.memory_space<vmem>>) attributes {dimension_semantics = [#tpu.dimension_semantics<parallel>], iteration_bounds = array<i64: 1>, scalar_prefetch = 0 : i64, scratch_operands = 0 : i64, tpu.core_type = #tpu.core_type<tc>, window_params = [{transform_indices = @transform_0, window_bounds = array<i64: 8, 32>}, {pipeline_mode = #tpu.pipeline_mode<synchronous>, transform_indices = @transform_1, window_bounds = array<i64: 32, 64>}, {pipeline_mode = #tpu.pipeline_mode<synchronous>, transform_indices = @transform_2, window_bounds = array<i64: 1, 64>}, {pipeline_mode = #tpu.pipeline_mode<synchronous>, transform_indices = @transform_3, window_bounds = array<i64: 64, 16>}, {pipeline_mode = #tpu.pipeline_mode<synchronous>, transform_indices = @transform_4, window_bounds = array<i64: 1, 16>}, {pipeline_mode = #tpu.pipeline_mode<synchronous>, transform_indices = @transform_5, window_bounds = array<i64: 16, 8>}, {pipeline_mode = #tpu.pipeline_mode<synchronous>, transform_indices = @transform_6, window_bounds = array<i64: 1, 8>}, {transform_indices = @transform_7, window_bounds = array<i64: 8, 8>}]} {
    %c0 = arith.constant 0 : index
    %c0_0 = arith.constant 0 : index
    %0 = vector.load %arg1[%c0, %c0_0] : memref<8x32xf32, #tpu.memory_space<vmem>>, vector<8x32xf32>
    %c0_1 = arith.constant 0 : index
    %c0_2 = arith.constant 0 : index
    %1 = vector.load %arg2[%c0_1, %c0_2] : memref<32x64xf32, #tpu.memory_space<vmem>>, vector<32x64xf32>
    %c0_3 = arith.constant 0 : index
    %c0_4 = arith.constant 0 : index
    %2 = vector.load %arg3[%c0_3, %c0_4] : memref<1x64xf32, #tpu.memory_space<vmem>>, vector<1x64xf32>
    %cst = arith.constant dense<0.000000e+00> : vector<8x64xf32>
    %3 = tpu.matmul %0, %1, %cst {dimension_numbers = #tpu.dot_dimension_numbers<[1], [0], [0], [1], [0, 0, 1, 1], [], []>} : vector<8x32xf32>, vector<32x64xf32>, vector<8x64xf32> -> vector<8x64xf32>
    %4 = vector.broadcast %2 : vector<1x64xf32> to vector<8x64xf32>
    %5 = arith.addf %3, %4 : vector<8x64xf32>
    %6 = math.tanh %5 : vector<8x64xf32>
    %c0_5 = arith.constant 0 : index
    %c0_6 = arith.constant 0 : index
    %7 = vector.load %arg4[%c0_5, %c0_6] : memref<64x16xf32, #tpu.memory_space<vmem>>, vector<64x16xf32>
    %c0_7 = arith.constant 0 : index
    %c0_8 = arith.constant 0 : index
    %8 = vector.load %arg5[%c0_7, %c0_8] : memref<1x16xf32, #tpu.memory_space<vmem>>, vector<1x16xf32>
    %cst_9 = arith.constant dense<0.000000e+00> : vector<8x16xf32>
    %9 = tpu.matmul %6, %7, %cst_9 {dimension_numbers = #tpu.dot_dimension_numbers<[1], [0], [0], [1], [0, 0, 1, 1], [], []>} : vector<8x64xf32>, vector<64x16xf32>, vector<8x16xf32> -> vector<8x16xf32>
    %10 = vector.broadcast %8 : vector<1x16xf32> to vector<8x16xf32>
    %11 = arith.addf %9, %10 : vector<8x16xf32>
    %12 = math.tanh %11 : vector<8x16xf32>
    %c0_10 = arith.constant 0 : index
    %c0_11 = arith.constant 0 : index
    %13 = vector.load %arg6[%c0_10, %c0_11] : memref<16x8xf32, #tpu.memory_space<vmem>>, vector<16x8xf32>
    %c0_12 = arith.constant 0 : index
    %c0_13 = arith.constant 0 : index
    %14 = vector.load %arg7[%c0_12, %c0_13] : memref<1x8xf32, #tpu.memory_space<vmem>>, vector<1x8xf32>
    %cst_14 = arith.constant dense<0.000000e+00> : vector<8x8xf32>
    %15 = tpu.matmul %12, %13, %cst_14 {dimension_numbers = #tpu.dot_dimension_numbers<[1], [0], [0], [1], [0, 0, 1, 1], [], []>} : vector<8x16xf32>, vector<16x8xf32>, vector<8x8xf32> -> vector<8x8xf32>
    %16 = vector.broadcast %14 : vector<1x8xf32> to vector<8x8xf32>
    %17 = arith.addf %15, %16 : vector<8x8xf32>
    %18 = math.tanh %17 : vector<8x8xf32>
    %c0_15 = arith.constant 0 : index
    %c0_16 = arith.constant 0 : index
    %19 = vector.load %arg8[%c0_15, %c0_16] : memref<8x8xf32, #tpu.memory_space<vmem>>, vector<8x8xf32>
    tpu.vector_store %arg8[%c0_15, %c0_16], %18 {strides = array<i32>} : memref<8x8xf32, #tpu.memory_space<vmem>>, vector<8x8xf32>,
    return
  }
  func.func @transform_0(%arg0: i32) -> (i32, i32) {
    %c0_i32 = arith.constant 0 : i32
    %c0_i32_0 = arith.constant 0 : i32
    return %arg0, %c0_i32 : i32, i32
  }
  func.func @transform_1(%arg0: i32) -> (i32, i32) {
    %c0_i32 = arith.constant 0 : i32
    %c0_i32_0 = arith.constant 0 : i32
    %c0_i32_1 = arith.constant 0 : i32
    return %c0_i32, %c0_i32_0 : i32, i32
  }
  func.func @transform_2(%arg0: i32) -> (i32, i32) {
    %c0_i32 = arith.constant 0 : i32
    %c0_i32_0 = arith.constant 0 : i32
    %c0_i32_1 = arith.constant 0 : i32
    return %c0_i32, %c0_i32_0 : i32, i32
  }
  func.func @transform_3(%arg0: i32) -> (i32, i32) {
    %c0_i32 = arith.constant 0 : i32
    %c0_i32_0 = arith.constant 0 : i32
    %c0_i32_1 = arith.constant 0 : i32
    return %c0_i32, %c0_i32_0 : i32, i32
  }
  func.func @transform_4(%arg0: i32) -> (i32, i32) {
    %c0_i32 = arith.constant 0 : i32
    %c0_i32_0 = arith.constant 0 : i32
    %c0_i32_1 = arith.constant 0 : i32
    return %c0_i32, %c0_i32_0 : i32, i32
  }
  func.func @transform_5(%arg0: i32) -> (i32, i32) {
    %c0_i32 = arith.constant 0 : i32
    %c0_i32_0 = arith.constant 0 : i32
    %c0_i32_1 = arith.constant 0 : i32
    return %c0_i32, %c0_i32_0 : i32, i32
  }
  func.func @transform_6(%arg0: i32) -> (i32, i32) {
    %c0_i32 = arith.constant 0 : i32
    %c0_i32_0 = arith.constant 0 : i32
    %c0_i32_1 = arith.constant 0 : i32
    return %c0_i32, %c0_i32_0 : i32, i32
  }
  func.func @transform_7(%arg0: i32) -> (i32, i32) {
    %c0_i32 = arith.constant 0 : i32
    %c0_i32_0 = arith.constant 0 : i32
    return %arg0, %c0_i32 : i32, i32
  }
}

</mosaic_0001>

<llo_original>
// kernel: encoder_forward.1
$region0: #{encoder_forward.1}
  #allocation0 [shape = 'u32[]', space=smem, size = 0x4, offset = 0x4, fixed_abs, tag = 'smem constant byte address 0x4 - core index']
  #allocation1 [shape = 'u32[144,128]{1,0:T(1,128)}', space=vmem, size = 0x12000, scoped, tag = 'internal scratch']
  %s0 = inlined_call_operand.vmem [shape: f32[8,32], index: 0, kind: input, shape index: {}]
  %s1 = inlined_call_operand.vmem [shape: f32[32,64], index: 1, kind: input, shape index: {}]
  %s2 = inlined_call_operand.vmem [shape: f32[1,64], index: 2, kind: input, shape index: {}]
  %s3 = inlined_call_operand.vmem [shape: f32[64,16], index: 3, kind: input, shape index: {}]
  %s4 = inlined_call_operand.vmem [shape: f32[1,16], index: 4, kind: input, shape index: {}]
  %s5 = inlined_call_operand.vmem [shape: f32[16,8], index: 5, kind: input, shape index: {}]
  %s6 = inlined_call_operand.vmem [shape: f32[1,8], index: 6, kind: input, shape index: {}]
  %s7 = inlined_call_operand.hbm [shape: f32[8,8], index: 7, kind: output, shape index: {}]
  %s8 = sld [smem:[#allocation0]]
  $region38: #{encoder_forward.1} parent=0
    _
  %s10 = ssub.s32 1, %s8
  %s11 = scalar_select 0, %s10, %s8
  $region1: #{encoder_forward.1} parent=0
    #allocation2 [shape = 'u8[4096]{0}', space=vmem, size = 0x1000, scoped, tag = 'output window, operand 0, single buffered']
    #allocation3 [shape = 's32[1]{0}', space=sflag, size = 0x4, scoped, tag = 'scoped memory for encoder_forward.1']
    %12 = vsyncpa [#allocation3], 0
    // Predicated region
    $region2: #{encoder_forward.1} parent=1 // pred_check
      _
    $region3: #{encoder_forward.1} parent=1 // pred_check_branch
      %14 = sbr.rel (0) target = $region5
    $region4: #{encoder_forward.1} parent=1 // pred_region
      _
    $region5: #{encoder_forward.1} parent=1 // pred_fallthru
      _
    // Predicated region
    $region6: #{encoder_forward.1} parent=1 // pred_check
      _
    $region7: #{encoder_forward.1} parent=1 // pred_check_branch
      %16 = sbr.rel (0) target = $region9
    $region8: #{encoder_forward.1} parent=1 // pred_region
      _
    $region9: #{encoder_forward.1} parent=1 // pred_fallthru
      _
    // Predicated region
    $region10: #{encoder_forward.1} parent=1 // pred_check
      _
    $region11: #{encoder_forward.1} parent=1 // pred_check_branch
      %18 = sbr.rel (0) target = $region13
    $region12: #{encoder_forward.1} parent=1 // pred_region
      _
    $region13: #{encoder_forward.1} parent=1 // pred_fallthru
      _
    // Predicated region
    $region14: #{encoder_forward.1} parent=1 // pred_check
      _
    $region15: #{encoder_forward.1} parent=1 // pred_check_branch
      %20 = sbr.rel (0) target = $region17
    $region16: #{encoder_forward.1} parent=1 // pred_region
      _
    $region17: #{encoder_forward.1} parent=1 // pred_fallthru
      _
    // Predicated region
    $region18: #{encoder_forward.1} parent=1 // pred_check
      _
    $region19: #{encoder_forward.1} parent=1 // pred_check_branch
      %22 = sbr.rel (0) target = $region21
    $region20: #{encoder_forward.1} parent=1 // pred_region
      _
    $region21: #{encoder_forward.1} parent=1 // pred_fallthru
      _
    // Predicated region
    $region22: #{encoder_forward.1} parent=1 // pred_check
      _
    $region23: #{encoder_forward.1} parent=1 // pred_check_branch
      %24 = sbr.rel (0) target = $region25
    $region24: #{encoder_forward.1} parent=1 // pred_region
      _
    $region25: #{encoder_forward.1} parent=1 // pred_fallthru
      _
    // Predicated region
    $region26: #{encoder_forward.1} parent=1 // pred_check
      _
    $region27: #{encoder_forward.1} parent=1 // pred_check_branch
      %26 = sbr.rel (0) target = $region29
    $region28: #{encoder_forward.1} parent=1 // pred_region
      _
    $region29: #{encoder_forward.1} parent=1 // pred_fallthru
      _
    %v27 = vld [vmem:[%s0] sm:$0xff]
    %v28 = vld [vmem:[%s1] sm:$0xff]
    %v29 = vld [vmem:[%s1 + $0x8] sm:$0xff]
    %v30 = vld [vmem:[%s1 + $0x10] sm:$0xff]
    %v31 = vld [vmem:[%s1 + $0x18] sm:$0xff]
    %v32 = vld [vmem:[%s2] sm:$0x1]
    %v34 = vlaneseq
    %v35 = vshrl.u32 %v34, 7
    %v36 = vsub.s32 0, %v35
    %v37 = vrot.slane %v32, %v36
    %vm39 = vcmask 261120
    %v41 = vsel %vm39, %v27, 0
    %43 = vmatprep.subr.mxu0 0.0
    %44 = vmatpush1.msra.mxu0 %v28
    %45 = vmatprep.subr.mxu0 0.0
    %46 = vmatpush1.msra.mxu0 %v29
    %47 = vmatprep.subr.mxu0 0.0
    %48 = vmatpush1.msra.mxu0 %v30
    %49 = vmatprep.subr.mxu0 0.0
    %50 = vmatpush1.msra.mxu0 %v31
    %51 = vmatprep.subr.mxu0 0.0
    %52 = vmatpush1.msra.mxu0 0.0
    %53 = vmatprep.subr.mxu0 0.0
    %54 = vmatpush1.msra.mxu0 0.0
    %55 = vmatprep.subr.mxu0 0.0
    %56 = vmatpush1.msra.mxu0 0.0
    %57 = vmatprep.subr.mxu0 0.0
    %58 = vmatpush1.msra.mxu0 0.0
    %59 = vmatprep.subr.mxu0 0.0
    %60 = vmatpush1.msra.mxu0 0.0
    %61 = vmatprep.subr.mxu0 0.0
    %62 = vmatpush1.msra.mxu0 0.0
    %63 = vmatprep.subr.mxu0 0.0
    %64 = vmatpush1.msra.mxu0 0.0
    %65 = vmatprep.subr.mxu0 0.0
    %66 = vmatpush1.msra.mxu0 0.0
    %67 = vmatprep.subr.mxu0 0.0
    %68 = vmatpush1.msra.mxu0 0.0
    %69 = vmatprep.subr.mxu0 0.0
    %70 = vmatpush1.msra.mxu0 0.0
    %71 = vmatprep.subr.mxu0 0.0
    %72 = vmatpush1.msra.mxu0 0.0
    %73 = vmatprep.subr.mxu0 0.0
    %74 = vmatpush1.msra.mxu0 0.0
    %75 = vmatprep.subr.mxu0 0.0
    %76 = vmatpush1.msra.mxu0 0.0
    %77 = vmatprep.subr.mxu0 0.0
    %78 = vmatpush1.msra.mxu0 0.0
    %79 = vmatprep.subr.mxu0 0.0
    %80 = vmatpush1.msra.mxu0 0.0
    %81 = vmatprep.subr.mxu0 0.0
    %82 = vmatpush1.msra.mxu0 0.0
    %83 = vmatprep.subr.mxu0 0.0
    %84 = vmatpush1.msra.mxu0 0.0
    %85 = vmatprep.subr.mxu0 0.0
    %86 = vmatpush1.msra.mxu0 0.0
    %87 = vmatprep.subr.mxu0 0.0
    %88 = vmatpush1.msra.mxu0 0.0
    %89 = vmatprep.subr.mxu0 0.0
    %90 = vmatpush1.msra.mxu0 0.0
    %91 = vmatprep.subr.mxu0 0.0
    %92 = vmatpush1.msra.mxu0 0.0
    %93 = vmatprep.subr.mxu0 0.0
    %94 = vmatpush1.msra.mxu0 0.0
    %95 = vmatprep.subr.mxu0 0.0
    %96 = vmatpush1.msra.mxu0 0.0
    %97 = vmatprep.subr.mxu0 0.0
    %98 = vmatpush1.msra.mxu0 0.0
    %99 = vmatprep.subr.mxu0 0.0
    %100 = vmatpush1.msra.mxu0 0.0
    %101 = vmatprep.subr.mxu0 0.0
    %102 = vmatpush1.msra.mxu0 0.0
    %103 = vmatprep.subr.mxu0 0.0
    %104 = vmatpush1.msra.mxu0 0.0
    %105 = vmatprep.subr.mxu0 0.0
    %106 = vmatpush1.msra.mxu0 0.0
    %107 = vmatprep.mubr.f32.mxu0 0.0
    %108 = vmatmul.mubr.f32.gmra.mrb[0].mxu0 %v41
    %v109 = vpop.f32.mrb[0].mxu0
    %v110 = vadd.f32 %v37, %v109
    %v111 = vpop.f32.mrb[0].mxu0
    %112 = vdwg.mxu0
    %v113 = vtanh.pop %v110
    %v114 = vld [vmem:[%s3] sm:$0xff]
    %v115 = vld [vmem:[%s3 + $0x8] sm:$0xff]
    %v116 = vld [vmem:[%s3 + $0x10] sm:$0xff]
    %v117 = vld [vmem:[%s3 + $0x18] sm:$0xff]
    %v118 = vld [vmem:[%s3 + $0x20] sm:$0xff]
    %v119 = vld [vmem:[%s3 + $0x28] sm:$0xff]
    %v120 = vld [vmem:[%s3 + $0x30] sm:$0xff]
    %v121 = vld [vmem:[%s3 + $0x38] sm:$0xff]
    %v122 = vld [vmem:[%s4] sm:$0x1]
    %v124 = vlaneseq
    %v125 = vshrl.u32 %v124, 7
    %v126 = vsub.s32 0, %v125
    %v127 = vrot.slane %v122, %v126
    %vm129 = vcmask 523264
    %v131 = vsel %vm129, %v113, 0
    %133 = vmatprep.subr.mxu0 0.0
    %134 = vmatpush1.msra.mxu0 %v114
    %135 = vmatprep.subr.mxu0 0.0
    %136 = vmatpush1.msra.mxu0 %v115
    %137 = vmatprep.subr.mxu0 0.0
    %138 = vmatpush1.msra.mxu0 %v116
    %139 = vmatprep.subr.mxu0 0.0
    %140 = vmatpush1.msra.mxu0 %v117
    %141 = vmatprep.subr.mxu0 0.0
    %142 = vmatpush1.msra.mxu0 %v118
    %143 = vmatprep.subr.mxu0 0.0
    %144 = vmatpush1.msra.mxu0 %v119
    %145 = vmatprep.subr.mxu0 0.0
    %146 = vmatpush1.msra.mxu0 %v120
    %147 = vmatprep.subr.mxu0 0.0
    %148 = vmatpush1.msra.mxu0 %v121
    %149 = vmatprep.subr.mxu0 0.0
    %150 = vmatpush1.msra.mxu0 0.0
    %151 = vmatprep.subr.mxu0 0.0
    %152 = vmatpush1.msra.mxu0 0.0
    %153 = vmatprep.subr.mxu0 0.0
    %154 = vmatpush1.msra.mxu0 0.0
    %155 = vmatprep.subr.mxu0 0.0
    %156 = vmatpush1.msra.mxu0 0.0
    %157 = vmatprep.subr.mxu0 0.0
    %158 = vmatpush1.msra.mxu0 0.0
    %159 = vmatprep.subr.mxu0 0.0
    %160 = vmatpush1.msra.mxu0 0.0
    %161 = vmatprep.subr.mxu0 0.0
    %162 = vmatpush1.msra.mxu0 0.0
    %163 = vmatprep.subr.mxu0 0.0
    %164 = vmatpush1.msra.mxu0 0.0
    %165 = vmatprep.subr.mxu0 0.0
    %166 = vmatpush1.msra.mxu0 0.0
    %167 = vmatprep.subr.mxu0 0.0
    %168 = vmatpush1.msra.mxu0 0.0
    %169 = vmatprep.subr.mxu0 0.0
    %170 = vmatpush1.msra.mxu0 0.0
    %171 = vmatprep.subr.mxu0 0.0
    %172 = vmatpush1.msra.mxu0 0.0
    %173 = vmatprep.subr.mxu0 0.0
    %174 = vmatpush1.msra.mxu0 0.0
    %175 = vmatprep.subr.mxu0 0.0
    %176 = vmatpush1.msra.mxu0 0.0
    %177 = vmatprep.subr.mxu0 0.0
    %178 = vmatpush1.msra.mxu0 0.0
    %179 = vmatprep.subr.mxu0 0.0
    %180 = vmatpush1.msra.mxu0 0.0
    %181 = vmatprep.subr.mxu0 0.0
    %182 = vmatpush1.msra.mxu0 0.0
    %183 = vmatprep.subr.mxu0 0.0
    %184 = vmatpush1.msra.mxu0 0.0
    %185 = vmatprep.subr.mxu0 0.0
    %186 = vmatpush1.msra.mxu0 0.0
    %187 = vmatprep.subr.mxu0 0.0
    %188 = vmatpush1.msra.mxu0 0.0
    %189 = vmatprep.subr.mxu0 0.0
    %190 = vmatpush1.msra.mxu0 0.0
    %191 = vmatprep.subr.mxu0 0.0
    %192 = vmatpush1.msra.mxu0 0.0
    %193 = vmatprep.subr.mxu0 0.0
    %194 = vmatpush1.msra.mxu0 0.0
    %195 = vmatprep.subr.mxu0 0.0
    %196 = vmatpush1.msra.mxu0 0.0
    %197 = vmatprep.mubr.f32.mxu0 0.0
    %198 = vmatmul.mubr.f32.gmra.mrb[0].mxu0 %v131
    %v199 = vpop.f32.mrb[0].mxu0
    %v200 = vadd.f32 %v127, %v199
    %v201 = vpop.f32.mrb[0].mxu0
    %202 = vdwg.mxu0
    %v203 = vtanh.pop %v200
    %v204 = vld [vmem:[%s5] sm:$0xff]
    %v205 = vld [vmem:[%s5 + $0x8] sm:$0xff]
    %v206 = vld [vmem:[%s6] sm:$0x1]
    %v208 = vlaneseq
    %v209 = vshrl.u32 %v208, 7
    %v210 = vsub.s32 0, %v209
    %v211 = vrot.slane %v206, %v210
    %vm213 = vcmask 130048
    %v215 = vsel %vm213, %v203, 0
    %217 = vmatprep.subr.mxu0 0.0
    %218 = vmatpush1.msra.mxu0 %v204
    %219 = vmatprep.subr.mxu0 0.0
    %220 = vmatpush1.msra.mxu0 %v205
    %221 = vmatprep.subr.mxu0 0.0
    %222 = vmatpush1.msra.mxu0 0.0
    %223 = vmatprep.subr.mxu0 0.0
    %224 = vmatpush1.msra.mxu0 0.0
    %225 = vmatprep.subr.mxu0 0.0
    %226 = vmatpush1.msra.mxu0 0.0
    %227 = vmatprep.subr.mxu0 0.0
    %228 = vmatpush1.msra.mxu0 0.0
    %229 = vmatprep.subr.mxu0 0.0
    %230 = vmatpush1.msra.mxu0 0.0
    %231 = vmatprep.subr.mxu0 0.0
    %232 = vmatpush1.msra.mxu0 0.0
    %233 = vmatprep.subr.mxu0 0.0
    %234 = vmatpush1.msra.mxu0 0.0
    %235 = vmatprep.subr.mxu0 0.0
    %236 = vmatpush1.msra.mxu0 0.0
    %237 = vmatprep.subr.mxu0 0.0
    %238 = vmatpush1.msra.mxu0 0.0
    %239 = vmatprep.subr.mxu0 0.0
    %240 = vmatpush1.msra.mxu0 0.0
    %241 = vmatprep.subr.mxu0 0.0
    %242 = vmatpush1.msra.mxu0 0.0
    %243 = vmatprep.subr.mxu0 0.0
    %244 = vmatpush1.msra.mxu0 0.0
    %245 = vmatprep.subr.mxu0 0.0
    %246 = vmatpush1.msra.mxu0 0.0
    %247 = vmatprep.subr.mxu0 0.0
    %248 = vmatpush1.msra.mxu0 0.0
    %249 = vmatprep.subr.mxu0 0.0
    %250 = vmatpush1.msra.mxu0 0.0
    %251 = vmatprep.subr.mxu0 0.0
    %252 = vmatpush1.msra.mxu0 0.0
    %253 = vmatprep.subr.mxu0 0.0
    %254 = vmatpush1.msra.mxu0 0.0
    %255 = vmatprep.subr.mxu0 0.0
    %256 = vmatpush1.msra.mxu0 0.0
    %257 = vmatprep.subr.mxu0 0.0
    %258 = vmatpush1.msra.mxu0 0.0
    %259 = vmatprep.subr.mxu0 0.0
    %260 = vmatpush1.msra.mxu0 0.0
    %261 = vmatprep.subr.mxu0 0.0
    %262 = vmatpush1.msra.mxu0 0.0
    %263 = vmatprep.subr.mxu0 0.0
    %264 = vmatpush1.msra.mxu0 0.0
    %265 = vmatprep.subr.mxu0 0.0
    %266 = vmatpush1.msra.mxu0 0.0
    %267 = vmatprep.subr.mxu0 0.0
    %268 = vmatpush1.msra.mxu0 0.0
    %269 = vmatprep.subr.mxu0 0.0
    %270 = vmatpush1.msra.mxu0 0.0
    %271 = vmatprep.subr.mxu0 0.0
    %272 = vmatpush1.msra.mxu0 0.0
    %273 = vmatprep.subr.mxu0 0.0
    %274 = vmatpush1.msra.mxu0 0.0
    %275 = vmatprep.subr.mxu0 0.0
    %276 = vmatpush1.msra.mxu0 0.0
    %277 = vmatprep.subr.mxu0 0.0
    %278 = vmatpush1.msra.mxu0 0.0
    %279 = vmatprep.subr.mxu0 0.0
    %280 = vmatpush1.msra.mxu0 0.0
    %281 = vmatprep.mubr.f32.mxu0 0.0
    %282 = vmatmul.mubr.f32.gmra.mrb[0].mxu0 %v215
    %v283 = vpop.f32.mrb[0].mxu0
    %v284 = vadd.f32 %v211, %v283
    %v285 = vpop.f32.mrb[0].mxu0
    %286 = vdwg.mxu0
    %v287 = vtanh.pop %v284
    %vm288 = vcmask 64512
    %289 = vst.msk [vmem:[#allocation2] sm:$0xff] %vm288, %v287
    // Predicated region
    $region30: #{encoder_forward.1} parent=1 // pred_check
      _
    $region31: #{encoder_forward.1} parent=1 // pred_check_branch
      %291 = sbr.rel (0) target = $region33
    $region32: #{encoder_forward.1} parent=1 // pred_region
      %s293 = ssub.s32 128, 128
      %294 = vsyncadd [#allocation3], %s293
      %s296 = sshll.u32 [#allocation2], 4
      %s297 = int_to_ptr.vmem [resolvable:$true] %s296
      %299 = dma.vmem_to_hbm [thread:$0]  %s297, 128, %s7, [#allocation3]
    $region33: #{encoder_forward.1} parent=1 // pred_fallthru
      _
    // Predicated region
    $region34: #{encoder_forward.1} parent=1 // pred_check
      _
    $region35: #{encoder_forward.1} parent=1 // pred_check_branch
      %301 = sbr.rel (0) target = $region37
    $region36: #{encoder_forward.1} parent=1 // pred_region
      %302 = dma.done [#allocation3], 128
    $region37: #{encoder_forward.1} parent=1 // pred_fallthru
      _
    %303 = vsyncpa [#allocation3], 1

</llo_original>
